<compile_context>
chip_gen: v7x
topology: tpu7x:2x2x1
jax: 0.10.0
libtpu: 0.0.40
codegen_flags: <defaults>
</compile_context>

<pallas_src>
import functools

import jax
import jax.numpy as jnp
from jax import lax
from jax.experimental import pallas as pl
from jax.experimental.pallas import tpu as pltpu


# Weight block lives in the first 128 lanes of the packed param tensor so the
# bias tile that follows starts on a lane-tile boundary.
_W_PAD_LANES = 128


# ----------------------------- Pallas kernel --------------------------------
def _fused_prob_kernel(x_ref, params_ref, out_ref, *, c_out, two_f, lower, upper):
    """Fused 1x1-conv (block-diag matmul) + LPM bias + scaled hard activations.

    x_ref:      (2F, B*P)              posi feats rows [0,F), nega rows [F,2F)
    params_ref: (2*C_out, 128 + B*P)   [:, :2F] = blockdiag(W+, W-), [:, 128:] = bias tile
    out_ref:    (2*C_out, B*P)         rows [0,C_out) posi, [C_out,2*C_out) nega
    """
    w = params_ref[:, :two_f]                    # (2*C_out, 2F) — tiny, in-tile slice
    bias = params_ref[:, _W_PAD_LANES:]          # (2*C_out, B*P) — lane-aligned slice

    y = jnp.dot(w, x_ref[...], preferred_element_type=jnp.float32) + bias

    half_range = 0.5 * (upper - lower)
    full_range = upper - lower

    # Per-row scale column: posi rows -> hardtanh remap, nega rows -> hardsigmoid remap.
    #   posi: lower + (clip(y,-1,1)+1)*half  == clip(y*half  + lower+half, lower, upper)
    #   nega: lower + clip(y/6+0.5,0,1)*full == clip(y*full/6 + lower+half, lower, upper)
    row = lax.broadcasted_iota(jnp.int32, (2 * c_out, 1), 0)
    scale = jnp.where(row < c_out, half_range, full_range / 6.0)
    offset = lower + half_range

    out_ref[...] = jnp.clip(y * scale + offset, lower, upper).astype(out_ref.dtype)


def _fused_prob_call(x, params, *, c_out, two_f, lower, upper):
    """Single-invocation pallas_call over the whole (tiny) problem, no grid."""
    out_cols = x.shape[1]
    kernel = functools.partial(
        _fused_prob_kernel,
        c_out=c_out,
        two_f=two_f,
        lower=float(lower),
        upper=float(upper),
    )
    return pl.pallas_call(
        kernel,
        out_shape=jax.ShapeDtypeStruct((2 * c_out, out_cols), jnp.float32),
        in_specs=[
            pl.BlockSpec(memory_space=pltpu.MemorySpace.VMEM),
            pl.BlockSpec(memory_space=pltpu.MemorySpace.VMEM),
        ],
        out_specs=pl.BlockSpec(memory_space=pltpu.MemorySpace.VMEM),
    )(x, params)


# ------------------------------ Module glue ---------------------------------
def _init_linear_as_conv2d(key, c_in, c_out):
    """Deterministic init of a 1x1 Conv2d (c_in -> c_out), PyTorch-style uniform."""
    kw, kb = jax.random.split(key)
    bound = 1.0 / jnp.sqrt(c_in)
    w = jax.random.uniform(kw, (c_out, c_in), jnp.float32, -bound, bound)
    b = jax.random.uniform(kb, (c_out,), jnp.float32, -bound, bound)
    return w, b


def make_probability_graph_generator(configs, topo_graph, key):
    """Builds params + a forward fn reproducing probability_graph_generator.forward (eval)."""
    assert configs["memory_type"] == "LPM"
    assert configs["local_obs"] and configs["global_obs"]
    gamma_lower, gamma_upper = configs["gamma"]
    n_gmb = configs["n_GMB"]
    n_feat = configs["n_feat"]
    c_in = n_feat + n_gmb
    c_out = configs["n_prob"]
    n = configs["n_nodes"]
    p = n * n
    batch = configs["batch_size"]

    k_pos, k_neg = jax.random.split(key)
    posi_w, posi_b = _init_linear_as_conv2d(k_pos, c_in, c_out)
    nega_w, nega_b = _init_linear_as_conv2d(k_neg, c_in, c_out)

    # LPM "learnable" matrices (eval mode: no noise added).
    posi_lpm = topo_graph.astype(jnp.float32)          # attribute '+'
    nega_lpm = 1.0 - topo_graph.astype(jnp.float32)    # attribute '-'

    # Channel concat order in the reference is (global_view, local_view):
    #   weight columns [:n_GMB] act on the LPM, [n_GMB:] on the local features.
    posi_w_g, posi_w_l = posi_w[:, :n_gmb], posi_w[:, n_gmb:]
    nega_w_g, nega_w_l = nega_w[:, :n_gmb], nega_w[:, n_gmb:]

    # Block-diagonal local-feature weight: one matmul for both signs.
    w_block = jnp.zeros((2 * c_out, 2 * n_feat), jnp.float32)
    w_block = w_block.at[:c_out, :n_feat].set(posi_w_l)
    w_block = w_block.at[c_out:, n_feat:].set(nega_w_l)

    # Batch-invariant LPM contribution folded into a per-pixel bias, tiled over batch.
    posi_bias_full = posi_w_g @ posi_lpm.reshape(n_gmb, p) + posi_b[:, None]   # (C_out, P)
    nega_bias_full = nega_w_g @ nega_lpm.reshape(n_gmb, p) + nega_b[:, None]   # (C_out, P)
    bias_stacked = jnp.concatenate([posi_bias_full, nega_bias_full], axis=0)   # (2C, P)
    bias_tiled = jnp.tile(bias_stacked, (1, batch)).astype(jnp.float32)        # (2C, B*P)

    # Packed param tensor: block-diag weight in first 128 lanes, then the bias tile.
    params = jnp.zeros((2 * c_out, _W_PAD_LANES + batch * p), jnp.float32)
    params = params.at[:, : 2 * n_feat].set(w_block)
    params = params.at[:, _W_PAD_LANES:].set(bias_tiled)

    def _forward(posi_feat_graph, nega_feat_graph):
        B, F, N, _ = posi_feat_graph.shape
        assert F == n_feat and N == n and B == batch

        # NCHW -> (F, B*P): posi/nega stacked along sublanes, batch along lanes.
        pf = jnp.transpose(posi_feat_graph.reshape(B, F, p), (1, 0, 2)).reshape(F, B * p)
        nf = jnp.transpose(nega_feat_graph.reshape(B, F, p), (1, 0, 2)).reshape(F, B * p)
        x = jnp.concatenate([pf, nf], axis=0).astype(jnp.float32)              # (2F, B*P)

        y = _fused_prob_call(
            x, params, c_out=c_out, two_f=2 * n_feat,
            lower=gamma_lower, upper=gamma_upper,
        )                                                                        # (2C, B*P)

        posi_prob = jnp.transpose(
            y[:c_out].reshape(c_out, B, p), (1, 0, 2)).reshape(B, c_out, N, N)
        nega_prob = jnp.transpose(
            y[c_out:].reshape(c_out, B, p), (1, 0, 2)).reshape(B, c_out, N, N)
        prob_cl_loss = 0.0   # configs['prob_cl_loss'] is False
        return posi_prob, nega_prob, prob_cl_loss

    # TODO(synk): if this op runs standalone every step, fuse it into the
    # producing/consuming kernel or batch many graphs per call — per-call
    # dispatch overhead dominates at these sizes.
    return jax.jit(_forward)


# --------------------------------- Main --------------------------------------
if __name__ == "__main__":
    configs = dict(
        gamma=(0.0, 1.0),
        memory_type="LPM",
        LPM_learnable=True,
        local_obs=True,
        global_obs=True,
        n_feat=4,
        n_GMB=4,
        n_prob=4,
        n_nodes=16,
        batch_size=2,
        graph_noise=0.1,
        prob_cl_loss=False,
    )

    key = jax.random.PRNGKey(0)
    k_topo, k_params, k_pos, k_neg = jax.random.split(key, 4)

    # topo_graph: (n_GMB, n_nodes, n_nodes) adjacency-like prior in {0, 1}
    topo_graph = (
        jax.random.uniform(
            k_topo, (configs["n_GMB"], configs["n_nodes"], configs["n_nodes"])
        )
        > 0.5
    ).astype(jnp.float32)

    forward = make_probability_graph_generator(configs, topo_graph, k_params)

    B, F, N = configs["batch_size"], configs["n_feat"], configs["n_nodes"]
    posi_feat_graph = jax.random.normal(k_pos, (B, F, N, N), jnp.float32)
    nega_feat_graph = jax.random.normal(k_neg, (B, F, N, N), jnp.float32)

    posi_prob, nega_prob, cl_loss = forward(posi_feat_graph, nega_feat_graph)
    jax.block_until_ready((posi_prob, nega_prob))

    assert posi_prob.shape == (B, configs["n_prob"], N, N)
    assert nega_prob.shape == (B, configs["n_prob"], N, N)
    assert bool(jnp.all(jnp.isfinite(posi_prob)))
    assert bool(jnp.all(jnp.isfinite(nega_prob)))
    gl, gu = configs["gamma"]
    assert bool(jnp.all((posi_prob >= gl) & (posi_prob <= gu)))
    assert bool(jnp.all((nega_prob >= gl) & (nega_prob <= gu)))
    assert float(cl_loss) == 0.0

    print("KERNEL_OK")
</pallas_src>

<mosaic_0001>
module attributes {stable_mosaic.version = 11 : i64} {
  func.func @_fused_prob_kernel(%arg0: memref<8x512xf32, #tpu.memory_space<vmem>>, %arg1: memref<8x640xf32, #tpu.memory_space<vmem>>, %arg2: memref<8x512xf32, #tpu.memory_space<vmem>>) attributes {dimension_semantics = [], scalar_prefetch = 0 : i64, scratch_operands = 0 : i64, tpu.core_type = #tpu.core_type<tc>} {
    %c0 = arith.constant 0 : index
    %c0_0 = arith.constant 0 : index
    %0 = vector.load %arg1[%c0, %c0_0] : memref<8x640xf32, #tpu.memory_space<vmem>>, vector<8x8xf32>
    %c0_1 = arith.constant 0 : index
    %c128 = arith.constant 128 : index
    %1 = vector.load %arg1[%c0_1, %c128] : memref<8x640xf32, #tpu.memory_space<vmem>>, vector<8x512xf32>
    %c0_2 = arith.constant 0 : index
    %c0_3 = arith.constant 0 : index
    %2 = vector.load %arg0[%c0_2, %c0_3] : memref<8x512xf32, #tpu.memory_space<vmem>>, vector<8x512xf32>
    %cst = arith.constant dense<0.000000e+00> : vector<8x512xf32>
    %3 = tpu.matmul %0, %2, %cst {dimension_numbers = #tpu.dot_dimension_numbers<[1], [0], [0], [1], [0, 0, 1, 1], [], []>} : vector<8x8xf32>, vector<8x512xf32>, vector<8x512xf32> -> vector<8x512xf32>
    %4 = arith.addf %3, %1 : vector<8x512xf32>
    %5 = tpu.iota {dimensions = array<i32: 0>} : vector<8x1xi32>
    %c4_i32 = arith.constant 4 : i32
    %6 = vector.broadcast %c4_i32 : i32 to vector<8x1xi32>
    %7 = arith.cmpi slt, %5, %6 : vector<8x1xi32>
    %cst_4 = arith.constant 5.000000e-01 : f32
    %cst_5 = arith.constant 0.166666672 : f32
    %8 = vector.broadcast %cst_4 : f32 to vector<8x1xf32>
    %9 = vector.broadcast %cst_5 : f32 to vector<8x1xf32>
    %10 = arith.select %7, %8, %9 : vector<8x1xi1>, vector<8x1xf32>
    %11 = vector.broadcast %10 : vector<8x1xf32> to vector<8x512xf32>
    %12 = arith.mulf %4, %11 : vector<8x512xf32>
    %cst_6 = arith.constant 5.000000e-01 : f32
    %13 = vector.broadcast %cst_6 : f32 to vector<8x512xf32>
    %14 = arith.addf %12, %13 : vector<8x512xf32>
    %cst_7 = arith.constant 0.000000e+00 : f32
    %cst_8 = arith.constant 1.000000e+00 : f32
    %15 = vector.broadcast %cst_7 : f32 to vector<8x512xf32>
    %16 = arith.maximumf %15, %14 : vector<8x512xf32>
    %17 = vector.broadcast %cst_8 : f32 to vector<8x512xf32>
    %18 = arith.minimumf %17, %16 : vector<8x512xf32>
    %c0_9 = arith.constant 0 : index
    %c0_10 = arith.constant 0 : index
    %19 = vector.load %arg2[%c0_9, %c0_10] : memref<8x512xf32, #tpu.memory_space<vmem>>, vector<8x512xf32>
    tpu.vector_store %arg2[%c0_9, %c0_10], %18 {strides = array<i32>} : memref<8x512xf32, #tpu.memory_space<vmem>>, vector<8x512xf32>,
    return
  }
}

</mosaic_0001>

<llo_original>
// kernel: _forward.1
$region0: #{_forward.1}
  #allocation0 [shape = 'u32[]', space=smem, size = 0x4, offset = 0x4, fixed_abs, tag = 'smem constant byte address 0x4 - core index']
  #allocation1 [shape = 'u32[144,128]{1,0:T(1,128)}', space=vmem, size = 0x12000, scoped, tag = 'internal scratch']
  %s0 = inlined_call_operand.vmem [shape: f32[8,512], index: 0, kind: input, shape index: {}]
  %s1 = inlined_call_operand.vmem [shape: f32[8,640], index: 1, kind: input, shape index: {}]
  %s2 = inlined_call_operand.vmem [shape: f32[8,512], index: 2, kind: output, shape index: {}]
  %s3 = sld [smem:[#allocation0]]
  $region18: #{_forward.1} parent=0
    _
  %s5 = ssub.s32 1, %s3
  %s6 = scalar_select 0, %s5, %s3
  // Predicated region
  $region2: #{_forward.1} parent=0 // pred_check
    _
  $region3: #{_forward.1} parent=0 // pred_check_branch
    %8 = sbr.rel (0) target = $region5
  $region4: #{_forward.1} parent=0 // pred_region
    _
  $region5: #{_forward.1} parent=0 // pred_fallthru
    _
  // Predicated region
  $region6: #{_forward.1} parent=0 // pred_check
    _
  $region7: #{_forward.1} parent=0 // pred_check_branch
    %10 = sbr.rel (0) target = $region9
  $region8: #{_forward.1} parent=0 // pred_region
    _
  $region9: #{_forward.1} parent=0 // pred_fallthru
    _
  %v11 = vld [vmem:[%s1] sm:$0xff]
  %v12 = vld [vmem:[%s1 + $0x8] sm:$0xff]
  %v13 = vld [vmem:[%s1 + $0x10] sm:$0xff]
  %v14 = vld [vmem:[%s1 + $0x18] sm:$0xff]
  %v15 = vld [vmem:[%s1 + $0x20] sm:$0xff]
  %v16 = vld [vmem:[%s0] sm:$0xff]
  %v17 = vld [vmem:[%s0 + $0x8] sm:$0xff]
  %v18 = vld [vmem:[%s0 + $0x10] sm:$0xff]
  %v19 = vld [vmem:[%s0 + $0x18] sm:$0xff]
  %vm20 = vcmask 64512
  %v22 = vsel %vm20, %v11, 0
  %24 = vmatprep.subr.mxu0 %v17
  %25 = vmatpush1.msra.mxu0 %v16
  %26 = vmatprep.subr.mxu0 0.0
  %27 = vmatpush1.msra.mxu0 0.0
  %28 = vmatprep.subr.mxu0 0.0
  %29 = vmatpush1.msra.mxu0 0.0
  %30 = vmatprep.subr.mxu0 0.0
  %31 = vmatpush1.msra.mxu0 0.0
  %32 = vmatprep.subr.mxu0 0.0
  %33 = vmatpush1.msra.mxu0 0.0
  %34 = vmatprep.subr.mxu0 0.0
  %35 = vmatpush1.msra.mxu0 0.0
  %36 = vmatprep.subr.mxu0 0.0
  %37 = vmatpush1.msra.mxu0 0.0
  %38 = vmatprep.subr.mxu0 0.0
  %39 = vmatpush1.msra.mxu0 0.0
  %40 = vmatprep.subr.mxu0 0.0
  %41 = vmatpush1.msra.mxu0 0.0
  %42 = vmatprep.subr.mxu0 0.0
  %43 = vmatpush1.msra.mxu0 0.0
  %44 = vmatprep.subr.mxu0 0.0
  %45 = vmatpush1.msra.mxu0 0.0
  %46 = vmatprep.subr.mxu0 0.0
  %47 = vmatpush1.msra.mxu0 0.0
  %48 = vmatprep.subr.mxu0 0.0
  %49 = vmatpush1.msra.mxu0 0.0
  %50 = vmatprep.subr.mxu0 0.0
  %51 = vmatpush1.msra.mxu0 0.0
  %52 = vmatprep.subr.mxu0 0.0
  %53 = vmatpush1.msra.mxu0 0.0
  %54 = vmatprep.subr.mxu0 0.0
  %55 = vmatpush1.msra.mxu0 0.0
  %56 = vmatprep.subr.mxu0 0.0
  %57 = vmatpush1.msra.mxu0 0.0
  %58 = vmatprep.subr.mxu0 0.0
  %59 = vmatpush1.msra.mxu0 0.0
  %60 = vmatprep.subr.mxu0 0.0
  %61 = vmatpush1.msra.mxu0 0.0
  %62 = vmatprep.subr.mxu0 0.0
  %63 = vmatpush1.msra.mxu0 0.0
  %64 = vmatprep.subr.mxu0 0.0
  %65 = vmatpush1.msra.mxu0 0.0
  %66 = vmatprep.subr.mxu0 0.0
  %67 = vmatpush1.msra.mxu0 0.0
  %68 = vmatprep.subr.mxu0 0.0
  %69 = vmatpush1.msra.mxu0 0.0
  %70 = vmatprep.subr.mxu0 0.0
  %71 = vmatpush1.msra.mxu0 0.0
  %72 = vmatprep.subr.mxu0 0.0
  %73 = vmatpush1.msra.mxu0 0.0
  %74 = vmatprep.subr.mxu0 0.0
  %75 = vmatpush1.msra.mxu0 0.0
  %76 = vmatprep.subr.mxu0 0.0
  %77 = vmatpush1.msra.mxu0 0.0
  %78 = vmatprep.subr.mxu0 0.0
  %79 = vmatpush1.msra.mxu0 0.0
  %80 = vmatprep.subr.mxu0 0.0
  %81 = vmatpush1.msra.mxu0 0.0
  %82 = vmatprep.subr.mxu0 0.0
  %83 = vmatpush1.msra.mxu0 0.0
  %84 = vmatprep.subr.mxu0 0.0
  %85 = vmatpush1.msra.mxu0 0.0
  %86 = vmatprep.subr.mxu0 0.0
  %87 = vmatpush1.msra.mxu0 0.0
  %88 = vmatprep.mubr.f32.mxu0 0.0
  %89 = vmatmul.mubr.f32.gmra.mrb[0].mxu0 %v22
  %v90 = vpop.f32.mrb[0].mxu0
  %v91 = vadd.f32 %v12, %v90
  %v92 = vpop.f32.mrb[0].mxu0
  %v93 = vadd.f32 %v13, %v92
  %94 = vdwg.mxu0
  %95 = vmatprep.subr.mxu0 %v19
  %96 = vmatpush1.msra.mxu0 %v18
  %97 = vmatprep.subr.mxu0 0.0
  %98 = vmatpush1.msra.mxu0 0.0
  %99 = vmatprep.subr.mxu0 0.0
  %100 = vmatpush1.msra.mxu0 0.0
  %101 = vmatprep.subr.mxu0 0.0
  %102 = vmatpush1.msra.mxu0 0.0
  %103 = vmatprep.subr.mxu0 0.0
  %104 = vmatpush1.msra.mxu0 0.0
  %105 = vmatprep.subr.mxu0 0.0
  %106 = vmatpush1.msra.mxu0 0.0
  %107 = vmatprep.subr.mxu0 0.0
  %108 = vmatpush1.msra.mxu0 0.0
  %109 = vmatprep.subr.mxu0 0.0
  %110 = vmatpush1.msra.mxu0 0.0
  %111 = vmatprep.subr.mxu0 0.0
  %112 = vmatpush1.msra.mxu0 0.0
  %113 = vmatprep.subr.mxu0 0.0
  %114 = vmatpush1.msra.mxu0 0.0
  %115 = vmatprep.subr.mxu0 0.0
  %116 = vmatpush1.msra.mxu0 0.0
  %117 = vmatprep.subr.mxu0 0.0
  %118 = vmatpush1.msra.mxu0 0.0
  %119 = vmatprep.subr.mxu0 0.0
  %120 = vmatpush1.msra.mxu0 0.0
  %121 = vmatprep.subr.mxu0 0.0
  %122 = vmatpush1.msra.mxu0 0.0
  %123 = vmatprep.subr.mxu0 0.0
  %124 = vmatpush1.msra.mxu0 0.0
  %125 = vmatprep.subr.mxu0 0.0
  %126 = vmatpush1.msra.mxu0 0.0
  %127 = vmatprep.subr.mxu0 0.0
  %128 = vmatpush1.msra.mxu0 0.0
  %129 = vmatprep.subr.mxu0 0.0
  %130 = vmatpush1.msra.mxu0 0.0
  %131 = vmatprep.subr.mxu0 0.0
  %132 = vmatpush1.msra.mxu0 0.0
  %133 = vmatprep.subr.mxu0 0.0
  %134 = vmatpush1.msra.mxu0 0.0
  %135 = vmatprep.subr.mxu0 0.0
  %136 = vmatpush1.msra.mxu0 0.0
  %137 = vmatprep.subr.mxu0 0.0
  %138 = vmatpush1.msra.mxu0 0.0
  %139 = vmatprep.subr.mxu0 0.0
  %140 = vmatpush1.msra.mxu0 0.0
  %141 = vmatprep.subr.mxu0 0.0
  %142 = vmatpush1.msra.mxu0 0.0
  %143 = vmatprep.subr.mxu0 0.0
  %144 = vmatpush1.msra.mxu0 0.0
  %145 = vmatprep.subr.mxu0 0.0
  %146 = vmatpush1.msra.mxu0 0.0
  %147 = vmatprep.subr.mxu0 0.0
  %148 = vmatpush1.msra.mxu0 0.0
  %149 = vmatprep.subr.mxu0 0.0
  %150 = vmatpush1.msra.mxu0 0.0
  %151 = vmatprep.subr.mxu0 0.0
  %152 = vmatpush1.msra.mxu0 0.0
  %153 = vmatprep.subr.mxu0 0.0
  %154 = vmatpush1.msra.mxu0 0.0
  %155 = vmatprep.subr.mxu0 0.0
  %156 = vmatpush1.msra.mxu0 0.0
  %157 = vmatprep.subr.mxu0 0.0
  %158 = vmatpush1.msra.mxu0 0.0
  %159 = vmatprep.mubr.f32.mxu0 0.0
  %160 = vmatmul.mubr.f32.gmra.mrb[0].mxu0 %v22
  %v161 = vpop.f32.mrb[0].mxu0
  %v162 = vadd.f32 %v14, %v161
  %v163 = vpop.f32.mrb[0].mxu0
  %v164 = vadd.f32 %v15, %v163
  %165 = vdwg.mxu0
  %v166 = vlaneseq
  %v167 = vshrl.u32 %v166, 7
  %vm168 = vcmp.lt.s32.totalorder %v167, 4
  %v169 = vsel %vm168, 0.5, 0.16666667
  %v170 = vmul.f32 %v91, %v169
  %v171 = vmul.f32 %v93, %v169
  %v172 = vmul.f32 %v162, %v169
  %v173 = vmul.f32 %v164, %v169
  %v174 = vadd.f32 %v170, 0.5
  %v175 = vadd.f32 %v171, 0.5
  %v176 = vadd.f32 %v172, 0.5
  %v177 = vadd.f32 %v173, 0.5
  %v178 = vmax.f32 %v174, 0.0
  %v179 = vmax.f32 %v175, 0.0
  %v180 = vmax.f32 %v176, 0.0
  %v181 = vmax.f32 %v177, 0.0
  %v182 = vmin.f32 %v178, 1.0
  %v183 = vmin.f32 %v179, 1.0
  %v184 = vmin.f32 %v180, 1.0
  %v185 = vmin.f32 %v181, 1.0
  %186 = vst [vmem:[%s2] sm:$0xff] %v182
  %187 = vst [vmem:[%s2 + $0x8] sm:$0xff] %v183
  %188 = vst [vmem:[%s2 + $0x10] sm:$0xff] %v184
  %189 = vst [vmem:[%s2 + $0x18] sm:$0xff] %v185
  // Predicated region
  $region10: #{_forward.1} parent=0 // pred_check
    _
  $region11: #{_forward.1} parent=0 // pred_check_branch
    %191 = sbr.rel (0) target = $region13
  $region12: #{_forward.1} parent=0 // pred_region
    _
  $region13: #{_forward.1} parent=0 // pred_fallthru
    _
  // Predicated region
  $region14: #{_forward.1} parent=0 // pred_check
    _
  $region15: #{_forward.1} parent=0 // pred_check_branch
    %193 = sbr.rel (0) target = $region17
  $region16: #{_forward.1} parent=0 // pred_region
    _
  $region17: #{_forward.1} parent=0 // pred_fallthru
    _

</llo_original>
